<compile_context>
chip_gen: v7x
topology: tpu7x:2x2x1
jax: 0.10.0
libtpu: 0.0.40
codegen_flags: <defaults>
</compile_context>

<pallas_src>
import functools

import jax
import jax.numpy as jnp
from jax.experimental import pallas as pl
from jax.experimental.pallas import tpu as pltpu

X_DIM = 784
E_HIDDEN = 50
LATENT_DIM = 5
D_HIDDEN = 50
HEAD_PAD = 128            # fused mu||logvar head padded to a full 128-lane output slab
DEFAULT_BATCH_TILE = 512  # fits double-buffered in <=16 MiB scoped VMEM on v5e;
                          # can be raised to 1024-2048 on v6e / 1024 on v7x.


def _round_up(n, m):
    return ((n + m - 1) // m) * m


def _vae_kernel(*refs, training: bool):
    if training:
        (x_ref, eps_ref,
         w1_ref, b1_ref, wh_ref, bh_ref, wd1_ref, bd1_ref, wd2_ref, bd2_ref,
         xrec_ref, head_ref) = refs
    else:
        (x_ref,
         w1_ref, b1_ref, wh_ref, bh_ref, wd1_ref, bd1_ref, wd2_ref, bd2_ref,
         xrec_ref, head_ref) = refs
        eps_ref = None

    x = x_ref[...]                                      # bf16 (TB, X_DIM)

    # Encoder: h = relu(x @ W1 + b1)  -- bf16 MXU matmul, f32 accumulation.
    h = jnp.dot(x, w1_ref[...], preferred_element_type=jnp.float32) + b1_ref[...]
    h = jnp.maximum(h, 0.0)

    # Fused mu||logvar head (single matmul, 128-lane padded output -> unmasked store).
    head = (jnp.dot(h.astype(jnp.bfloat16), wh_ref[...],
                    preferred_element_type=jnp.float32) + bh_ref[...])
    head_ref[...] = head

    mu = head[:, :LATENT_DIM]
    logvar = head[:, LATENT_DIM:2 * LATENT_DIM]

    # Reparameterization: z = eps * exp(0.5 * logvar) + mu (training), else z = mu.
    # Kept in f32 (exp rides the EUP slot; no bf16 elementwise needed on v5e).
    if training:
        z = eps_ref[...] * jnp.exp(0.5 * logvar) + mu
    else:
        z = mu

    # Decoder: x_recon = relu(z @ Wd1 + bd1) @ Wd2 + bd2
    hd = (jnp.dot(z.astype(jnp.bfloat16), wd1_ref[...],
                  preferred_element_type=jnp.float32) + bd1_ref[...])
    hd = jnp.maximum(hd, 0.0)
    xrec = (jnp.dot(hd.astype(jnp.bfloat16), wd2_ref[...],
                    preferred_element_type=jnp.float32) + bd2_ref[...])
    xrec_ref[...] = xrec.astype(xrec_ref.dtype)


def _kernel_params(params):
    """Cast weights to bf16 and fuse/pad the mu/logvar heads to a 128-wide slab."""
    wh = jnp.zeros((E_HIDDEN, HEAD_PAD), jnp.float32)
    wh = wh.at[:, :LATENT_DIM].set(params["wmu"])
    wh = wh.at[:, LATENT_DIM:2 * LATENT_DIM].set(params["wlv"])
    bh = jnp.zeros((1, HEAD_PAD), jnp.float32)
    bh = bh.at[:, :LATENT_DIM].set(params["bmu"])
    bh = bh.at[:, LATENT_DIM:2 * LATENT_DIM].set(params["blv"])
    return dict(
        w1=params["w1"].astype(jnp.bfloat16), b1=params["b1"],
        wh=wh.astype(jnp.bfloat16), bh=bh,
        wd1=params["wd1"].astype(jnp.bfloat16), bd1=params["bd1"],
        wd2=params["wd2"].astype(jnp.bfloat16), bd2=params["bd2"],
    )


def vae_forward(x, params, eps=None, *, training=True, batch_tile=DEFAULT_BATCH_TILE):
    """x: any shape reshaping to (-1, X_DIM) (matches PyTorch x.view(-1, 784))."""
    x2d = x.reshape(-1, X_DIM).astype(jnp.float32)
    b = x2d.shape[0]

    tb = min(batch_tile, _round_up(b, 8))
    b_pad = _round_up(b, tb)

    x_in = jnp.pad(x2d, ((0, b_pad - b), (0, 0))).astype(jnp.bfloat16)
    kp = _kernel_params(params)

    def batched(dim):
        return pl.BlockSpec((tb, dim), lambda i: (i, 0))

    def resident(shape):
        return pl.BlockSpec(shape, lambda i: (0, 0))

    weight_specs = [
        resident((X_DIM, E_HIDDEN)), resident((1, E_HIDDEN)),
        resident((E_HIDDEN, HEAD_PAD)), resident((1, HEAD_PAD)),
        resident((LATENT_DIM, D_HIDDEN)), resident((1, D_HIDDEN)),
        resident((D_HIDDEN, X_DIM)), resident((1, X_DIM)),
    ]
    weight_args = [kp["w1"], kp["b1"], kp["wh"], kp["bh"],
                   kp["wd1"], kp["bd1"], kp["wd2"], kp["bd2"]]

    if training:
        if eps is None:
            raise ValueError("eps is required when training=True")
        eps_in = jnp.pad(eps.astype(jnp.float32), ((0, b_pad - b), (0, 0)))
        in_specs = [batched(X_DIM), batched(LATENT_DIM)] + weight_specs
        args = [x_in, eps_in] + weight_args
    else:
        in_specs = [batched(X_DIM)] + weight_specs
        args = [x_in] + weight_args

    out_shapes = (
        jax.ShapeDtypeStruct((b_pad, X_DIM), jnp.float32),     # x_recon
        jax.ShapeDtypeStruct((b_pad, HEAD_PAD), jnp.float32),  # mu || logvar (padded)
    )
    out_specs = (batched(X_DIM), batched(HEAD_PAD))

    x_recon, head = pl.pallas_call(
        functools.partial(_vae_kernel, training=training),
        grid=(b_pad // tb,),
        in_specs=in_specs,
        out_specs=out_specs,
        out_shape=out_shapes,
        compiler_params=pltpu.CompilerParams(
            dimension_semantics=("parallel",),       # megacore sharding on v7x
            vmem_limit_bytes=32 * 1024 * 1024,
        ),
    )(*args)

    x_recon = x_recon[:b]
    mu = head[:b, :LATENT_DIM]
    logvar = head[:b, LATENT_DIM:2 * LATENT_DIM]
    return x_recon, mu, logvar


def init_params(key):
    """torch.nn.Linear-style init: U(-1/sqrt(fan_in), 1/sqrt(fan_in)).

    Weights stored transposed as (in_features, out_features); biases as (1, out_features).
    """
    def linear(key, fan_in, fan_out):
        kw, kb = jax.random.split(key)
        bound = 1.0 / jnp.sqrt(fan_in)
        w = jax.random.uniform(kw, (fan_in, fan_out), jnp.float32, -bound, bound)
        b = jax.random.uniform(kb, (1, fan_out), jnp.float32, -bound, bound)
        return w, b

    k1, k2, k3, k4, k5 = jax.random.split(key, 5)
    w1, b1 = linear(k1, X_DIM, E_HIDDEN)
    wmu, bmu = linear(k2, E_HIDDEN, LATENT_DIM)
    wlv, blv = linear(k3, E_HIDDEN, LATENT_DIM)
    wd1, bd1 = linear(k4, LATENT_DIM, D_HIDDEN)
    wd2, bd2 = linear(k5, D_HIDDEN, X_DIM)
    return dict(w1=w1, b1=b1, wmu=wmu, bmu=bmu, wlv=wlv, blv=blv,
                wd1=wd1, bd1=bd1, wd2=wd2, bd2=bd2)


def vae_forward_ref(x, params, eps=None, *, training=True):
    """Pure-JAX reference using the same mixed precision (bf16 matmuls, f32 accumulate)."""
    f32, bf = jnp.float32, jnp.bfloat16
    x2d = x.reshape(-1, X_DIM).astype(f32)
    h = jnp.maximum(
        jnp.dot(x2d.astype(bf), params["w1"].astype(bf), preferred_element_type=f32)
        + params["b1"], 0.0)
    hb = h.astype(bf)
    mu = jnp.dot(hb, params["wmu"].astype(bf), preferred_element_type=f32) + params["bmu"]
    logvar = jnp.dot(hb, params["wlv"].astype(bf), preferred_element_type=f32) + params["blv"]
    z = eps * jnp.exp(0.5 * logvar) + mu if training else mu
    hd = jnp.maximum(
        jnp.dot(z.astype(bf), params["wd1"].astype(bf), preferred_element_type=f32)
        + params["bd1"], 0.0)
    x_recon = (jnp.dot(hd.astype(bf), params["wd2"].astype(bf), preferred_element_type=f32)
               + params["bd2"])
    return x_recon, mu, logvar


if __name__ == "__main__":
    key = jax.random.PRNGKey(0)
    k_param, k_x, k_eps = jax.random.split(key, 3)

    params = init_params(k_param)

    # NCHW input like PyTorch MNIST: (B, 1, 28, 28) -> view(-1, 784)
    x = jax.random.normal(k_x, (2, 1, 28, 28), jnp.float32)
    eps = jax.random.normal(k_eps, (2, LATENT_DIM), jnp.float32)

    # Training-mode forward (reparameterization with provided noise).
    x_recon, mu, logvar = vae_forward(x, params, eps, training=True)
    jax.block_until_ready((x_recon, mu, logvar))

    xr_ref, mu_ref, lv_ref = vae_forward_ref(x, params, eps, training=True)
    assert x_recon.shape == (2, X_DIM) and mu.shape == (2, LATENT_DIM)
    assert jnp.allclose(x_recon, xr_ref, atol=5e-3, rtol=5e-3)
    assert jnp.allclose(mu, mu_ref, atol=5e-3, rtol=5e-3)
    assert jnp.allclose(logvar, lv_ref, atol=5e-3, rtol=5e-3)

    # Eval-mode forward (eps input/DMA skipped entirely).
    xr_e, mu_e, lv_e = vae_forward(x, params, training=False)
    jax.block_until_ready((xr_e, mu_e, lv_e))
    xr_er, mu_er, lv_er = vae_forward_ref(x, params, training=False)
    assert jnp.allclose(xr_e, xr_er, atol=5e-3, rtol=5e-3)
    assert jnp.allclose(mu_e, mu_er, atol=5e-3, rtol=5e-3)
    assert jnp.allclose(lv_e, lv_er, atol=5e-3, rtol=5e-3)

    print("KERNEL_OK")
</pallas_src>

<mosaic_0001>
module attributes {stable_mosaic.version = 11 : i64} {
  func.func @_vae_kernel(%arg0: i32, %arg1: memref<8x784xbf16, #tpu.memory_space<vmem>>, %arg2: memref<8x5xf32, #tpu.memory_space<vmem>>, %arg3: memref<784x50xbf16, #tpu.memory_space<vmem>>, %arg4: memref<1x50xf32, #tpu.memory_space<vmem>>, %arg5: memref<50x128xbf16, #tpu.memory_space<vmem>>, %arg6: memref<1x128xf32, #tpu.memory_space<vmem>>, %arg7: memref<5x50xbf16, #tpu.memory_space<vmem>>, %arg8: memref<1x50xf32, #tpu.memory_space<vmem>>, %arg9: memref<50x784xbf16, #tpu.memory_space<vmem>>, %arg10: memref<1x784xf32, #tpu.memory_space<vmem>>, %arg11: memref<8x784xf32, #tpu.memory_space<vmem>>, %arg12: memref<8x128xf32, #tpu.memory_space<vmem>>) attributes {dimension_semantics = [#tpu.dimension_semantics<parallel>], iteration_bounds = array<i64: 1>, scalar_prefetch = 0 : i64, scratch_operands = 0 : i64, tpu.core_type = #tpu.core_type<tc>, window_params = [{transform_indices = @transform_0, window_bounds = array<i64: 8, 784>}, {transform_indices = @transform_1, window_bounds = array<i64: 8, 5>}, {pipeline_mode = #tpu.pipeline_mode<synchronous>, transform_indices = @transform_2, window_bounds = array<i64: 784, 50>}, {pipeline_mode = #tpu.pipeline_mode<synchronous>, transform_indices = @transform_3, window_bounds = array<i64: 1, 50>}, {pipeline_mode = #tpu.pipeline_mode<synchronous>, transform_indices = @transform_4, window_bounds = array<i64: 50, 128>}, {pipeline_mode = #tpu.pipeline_mode<synchronous>, transform_indices = @transform_5, window_bounds = array<i64: 1, 128>}, {pipeline_mode = #tpu.pipeline_mode<synchronous>, transform_indices = @transform_6, window_bounds = array<i64: 5, 50>}, {pipeline_mode = #tpu.pipeline_mode<synchronous>, transform_indices = @transform_7, window_bounds = array<i64: 1, 50>}, {pipeline_mode = #tpu.pipeline_mode<synchronous>, transform_indices = @transform_8, window_bounds = array<i64: 50, 784>}, {pipeline_mode = #tpu.pipeline_mode<synchronous>, transform_indices = @transform_9, window_bounds = array<i64: 1, 784>}, {transform_indices = @transform_10, window_bounds = array<i64: 8, 784>}, {transform_indices = @transform_11, window_bounds = array<i64: 8, 128>}]} {
    %c0 = arith.constant 0 : index
    %c0_0 = arith.constant 0 : index
    %0 = vector.load %arg1[%c0, %c0_0] : memref<8x784xbf16, #tpu.memory_space<vmem>>, vector<8x784xbf16>
    %c0_1 = arith.constant 0 : index
    %c0_2 = arith.constant 0 : index
    %1 = vector.load %arg3[%c0_1, %c0_2] : memref<784x50xbf16, #tpu.memory_space<vmem>>, vector<784x50xbf16>
    %cst = arith.constant dense<0.000000e+00> : vector<8x50xf32>
    %2 = tpu.matmul %0, %1, %cst {dimension_numbers = #tpu.dot_dimension_numbers<[1], [0], [0], [1], [0, 0, 1, 1], [], []>} : vector<8x784xbf16>, vector<784x50xbf16>, vector<8x50xf32> -> vector<8x50xf32>
    %c0_3 = arith.constant 0 : index
    %c0_4 = arith.constant 0 : index
    %3 = vector.load %arg4[%c0_3, %c0_4] : memref<1x50xf32, #tpu.memory_space<vmem>>, vector<1x50xf32>
    %4 = vector.broadcast %3 : vector<1x50xf32> to vector<8x50xf32>
    %5 = arith.addf %2, %4 : vector<8x50xf32>
    %cst_5 = arith.constant 0.000000e+00 : f32
    %6 = vector.broadcast %cst_5 : f32 to vector<8x50xf32>
    %7 = arith.maximumf %5, %6 : vector<8x50xf32>
    %8 = arith.truncf %7 : vector<8x50xf32> to vector<8x50xbf16>
    %c0_6 = arith.constant 0 : index
    %c0_7 = arith.constant 0 : index
    %9 = vector.load %arg5[%c0_6, %c0_7] : memref<50x128xbf16, #tpu.memory_space<vmem>>, vector<50x128xbf16>
    %cst_8 = arith.constant dense<0.000000e+00> : vector<8x128xf32>
    %10 = tpu.matmul %8, %9, %cst_8 {dimension_numbers = #tpu.dot_dimension_numbers<[1], [0], [0], [1], [0, 0, 1, 1], [], []>} : vector<8x50xbf16>, vector<50x128xbf16>, vector<8x128xf32> -> vector<8x128xf32>
    %c0_9 = arith.constant 0 : index
    %c0_10 = arith.constant 0 : index
    %11 = vector.load %arg6[%c0_9, %c0_10] : memref<1x128xf32, #tpu.memory_space<vmem>>, vector<1x128xf32>
    %12 = vector.broadcast %11 : vector<1x128xf32> to vector<8x128xf32>
    %13 = arith.addf %10, %12 : vector<8x128xf32>
    %c0_11 = arith.constant 0 : index
    %c0_12 = arith.constant 0 : index
    %14 = vector.load %arg12[%c0_11, %c0_12] : memref<8x128xf32, #tpu.memory_space<vmem>>, vector<8x128xf32>
    tpu.vector_store %arg12[%c0_11, %c0_12], %13 {strides = array<i32>} : memref<8x128xf32, #tpu.memory_space<vmem>>, vector<8x128xf32>,
    %15 = vector.extract_strided_slice %13 {offsets = [0, 0], sizes = [8, 5], strides = [1, 1]} : vector<8x128xf32> to vector<8x5xf32>
    %16 = vector.extract_strided_slice %13 {offsets = [0, 5], sizes = [8, 5], strides = [1, 1]} : vector<8x128xf32> to vector<8x5xf32>
    %c0_13 = arith.constant 0 : index
    %c0_14 = arith.constant 0 : index
    %17 = vector.load %arg2[%c0_13, %c0_14] : memref<8x5xf32, #tpu.memory_space<vmem>>, vector<8x5xf32>
    %cst_15 = arith.constant 5.000000e-01 : f32
    %18 = vector.broadcast %cst_15 : f32 to vector<8x5xf32>
    %19 = arith.mulf %18, %16 : vector<8x5xf32>
    %20 = math.exp %19 : vector<8x5xf32>
    %21 = arith.mulf %17, %20 : vector<8x5xf32>
    %22 = arith.addf %21, %15 : vector<8x5xf32>
    %23 = arith.truncf %22 : vector<8x5xf32> to vector<8x5xbf16>
    %c0_16 = arith.constant 0 : index
    %c0_17 = arith.constant 0 : index
    %24 = vector.load %arg7[%c0_16, %c0_17] : memref<5x50xbf16, #tpu.memory_space<vmem>>, vector<5x50xbf16>
    %cst_18 = arith.constant dense<0.000000e+00> : vector<8x50xf32>
    %25 = tpu.matmul %23, %24, %cst_18 {dimension_numbers = #tpu.dot_dimension_numbers<[1], [0], [0], [1], [0, 0, 1, 1], [], []>} : vector<8x5xbf16>, vector<5x50xbf16>, vector<8x50xf32> -> vector<8x50xf32>
    %c0_19 = arith.constant 0 : index
    %c0_20 = arith.constant 0 : index
    %26 = vector.load %arg8[%c0_19, %c0_20] : memref<1x50xf32, #tpu.memory_space<vmem>>, vector<1x50xf32>
    %27 = vector.broadcast %26 : vector<1x50xf32> to vector<8x50xf32>
    %28 = arith.addf %25, %27 : vector<8x50xf32>
    %cst_21 = arith.constant 0.000000e+00 : f32
    %29 = vector.broadcast %cst_21 : f32 to vector<8x50xf32>
    %30 = arith.maximumf %28, %29 : vector<8x50xf32>
    %31 = arith.truncf %30 : vector<8x50xf32> to vector<8x50xbf16>
    %c0_22 = arith.constant 0 : index
    %c0_23 = arith.constant 0 : index
    %32 = vector.load %arg9[%c0_22, %c0_23] : memref<50x784xbf16, #tpu.memory_space<vmem>>, vector<50x784xbf16>
    %cst_24 = arith.constant dense<0.000000e+00> : vector<8x784xf32>
    %33 = tpu.matmul %31, %32, %cst_24 {dimension_numbers = #tpu.dot_dimension_numbers<[1], [0], [0], [1], [0, 0, 1, 1], [], []>} : vector<8x50xbf16>, vector<50x784xbf16>, vector<8x784xf32> -> vector<8x784xf32>
    %c0_25 = arith.constant 0 : index
    %c0_26 = arith.constant 0 : index
    %34 = vector.load %arg10[%c0_25, %c0_26] : memref<1x784xf32, #tpu.memory_space<vmem>>, vector<1x784xf32>
    %35 = vector.broadcast %34 : vector<1x784xf32> to vector<8x784xf32>
    %36 = arith.addf %33, %35 : vector<8x784xf32>
    %c0_27 = arith.constant 0 : index
    %c0_28 = arith.constant 0 : index
    %37 = vector.load %arg11[%c0_27, %c0_28] : memref<8x784xf32, #tpu.memory_space<vmem>>, vector<8x784xf32>
    tpu.vector_store %arg11[%c0_27, %c0_28], %36 {strides = array<i32>} : memref<8x784xf32, #tpu.memory_space<vmem>>, vector<8x784xf32>,
    return
  }
  func.func @transform_0(%arg0: i32) -> (i32, i32) {
    %c0_i32 = arith.constant 0 : i32
    %c0_i32_0 = arith.constant 0 : i32
    return %arg0, %c0_i32 : i32, i32
  }
  func.func @transform_1(%arg0: i32) -> (i32, i32) {
    %c0_i32 = arith.constant 0 : i32
    %c0_i32_0 = arith.constant 0 : i32
    return %arg0, %c0_i32 : i32, i32
  }
  func.func @transform_2(%arg0: i32) -> (i32, i32) {
    %c0_i32 = arith.constant 0 : i32
    %c0_i32_0 = arith.constant 0 : i32
    %c0_i32_1 = arith.constant 0 : i32
    return %c0_i32, %c0_i32_0 : i32, i32
  }
  func.func @transform_3(%arg0: i32) -> (i32, i32) {
    %c0_i32 = arith.constant 0 : i32
    %c0_i32_0 = arith.constant 0 : i32
    %c0_i32_1 = arith.constant 0 : i32
    return %c0_i32, %c0_i32_0 : i32, i32
  }
  func.func @transform_4(%arg0: i32) -> (i32, i32) {
    %c0_i32 = arith.constant 0 : i32
    %c0_i32_0 = arith.constant 0 : i32
    %c0_i32_1 = arith.constant 0 : i32
    return %c0_i32, %c0_i32_0 : i32, i32
  }
  func.func @transform_5(%arg0: i32) -> (i32, i32) {
    %c0_i32 = arith.constant 0 : i32
    %c0_i32_0 = arith.constant 0 : i32
    %c0_i32_1 = arith.constant 0 : i32
    return %c0_i32, %c0_i32_0 : i32, i32
  }
  func.func @transform_6(%arg0: i32) -> (i32, i32) {
    %c0_i32 = arith.constant 0 : i32
    %c0_i32_0 = arith.constant 0 : i32
    %c0_i32_1 = arith.constant 0 : i32
    return %c0_i32, %c0_i32_0 : i32, i32
  }
  func.func @transform_7(%arg0: i32) -> (i32, i32) {
    %c0_i32 = arith.constant 0 : i32
    %c0_i32_0 = arith.constant 0 : i32
    %c0_i32_1 = arith.constant 0 : i32
    return %c0_i32, %c0_i32_0 : i32, i32
  }
  func.func @transform_8(%arg0: i32) -> (i32, i32) {
    %c0_i32 = arith.constant 0 : i32
    %c0_i32_0 = arith.constant 0 : i32
    %c0_i32_1 = arith.constant 0 : i32
    return %c0_i32, %c0_i32_0 : i32, i32
  }
  func.func @transform_9(%arg0: i32) -> (i32, i32) {
    %c0_i32 = arith.constant 0 : i32
    %c0_i32_0 = arith.constant 0 : i32
    %c0_i32_1 = arith.constant 0 : i32
    return %c0_i32, %c0_i32_0 : i32, i32
  }
  func.func @transform_10(%arg0: i32) -> (i32, i32) {
    %c0_i32 = arith.constant 0 : i32
    %c0_i32_0 = arith.constant 0 : i32
    return %arg0, %c0_i32 : i32, i32
  }
  func.func @transform_11(%arg0: i32) -> (i32, i32) {
    %c0_i32 = arith.constant 0 : i32
    %c0_i32_0 = arith.constant 0 : i32
    return %arg0, %c0_i32 : i32, i32
  }
}

</mosaic_0001>

<llo_original>
// kernel: tpu_custom_call.1
$region0: #{tpu_custom_call.1}
  #allocation0 [shape = 'u32[]', space=smem, size = 0x4, offset = 0x4, fixed_abs, tag = 'smem constant byte address 0x4 - core index']
  #allocation1 [shape = 'u32[144,128]{1,0:T(1,128)}', space=vmem, size = 0x12000, scoped, tag = 'internal scratch']
  %s0 = inlined_call_operand.vmem [shape: bf16[8,784], index: 0, kind: input, shape index: {}]
  %s1 = inlined_call_operand.vmem [shape: f32[8,5], index: 1, kind: input, shape index: {}]
  %s2 = inlined_call_operand.vmem [shape: bf16[784,50], index: 2, kind: input, shape index: {}]
  %s3 = inlined_call_operand.vmem [shape: f32[1,50], index: 3, kind: input, shape index: {}]
  %s4 = inlined_call_operand.vmem [shape: bf16[50,128], index: 4, kind: input, shape index: {}]
  %s5 = inlined_call_operand.vmem [shape: f32[1,128], index: 5, kind: input, shape index: {}]
  %s6 = inlined_call_operand.vmem [shape: bf16[5,50], index: 6, kind: input, shape index: {}]
  %s7 = inlined_call_operand.vmem [shape: f32[1,50], index: 7, kind: input, shape index: {}]
  %s8 = inlined_call_operand.vmem [shape: bf16[50,784], index: 8, kind: input, shape index: {}]
  %s9 = inlined_call_operand.vmem [shape: f32[1,784], index: 9, kind: input, shape index: {}]
  %s10 = inlined_call_operand.hbm [shape: f32[8,784], index: 10, kind: output, shape index: {0}]
  %s11 = inlined_call_operand.hbm [shape: f32[8,128], index: 11, kind: output, shape index: {1}]
  %12 = xla_tuple %s10, %s11
  %s13 = sld [smem:[#allocation0]]
  $region58: #{tpu_custom_call.1} parent=0
    _
  %s15 = ssub.s32 1, %s13
  %s16 = scalar_select 0, %s15, %s13
  $region1: #{tpu_custom_call.1} parent=0
    #allocation2 [shape = 'u8[28672]{0}', space=vmem, size = 0x7000, scoped, tag = 'output window, operand 0, single buffered']
    #allocation3 [shape = 's32[1]{0}', space=sflag, size = 0x4, scoped, tag = 'scoped memory for tpu_custom_call.1']
    #allocation4 [shape = 'u8[4096]{0}', space=vmem, size = 0x1000, scoped, tag = 'output window, operand 1, single buffered']
    #allocation5 [shape = 's32[1]{0}', space=sflag, size = 0x4, scoped, tag = 'scoped memory for tpu_custom_call.1']
    %17 = vsyncpa [#allocation3], 0
    %18 = vsyncpa [#allocation5], 0
    // Predicated region
    $region2: #{tpu_custom_call.1} parent=1 // pred_check
      _
    $region3: #{tpu_custom_call.1} parent=1 // pred_check_branch
      %20 = sbr.rel (0) target = $region5
    $region4: #{tpu_custom_call.1} parent=1 // pred_region
      _
    $region5: #{tpu_custom_call.1} parent=1 // pred_fallthru
      _
    // Predicated region
    $region6: #{tpu_custom_call.1} parent=1 // pred_check
      _
    $region7: #{tpu_custom_call.1} parent=1 // pred_check_branch
      %22 = sbr.rel (0) target = $region9
    $region8: #{tpu_custom_call.1} parent=1 // pred_region
      _
    $region9: #{tpu_custom_call.1} parent=1 // pred_fallthru
      _
    // Predicated region
    $region10: #{tpu_custom_call.1} parent=1 // pred_check
      _
    $region11: #{tpu_custom_call.1} parent=1 // pred_check_branch
      %24 = sbr.rel (0) target = $region13
    $region12: #{tpu_custom_call.1} parent=1 // pred_region
      _
    $region13: #{tpu_custom_call.1} parent=1 // pred_fallthru
      _
    // Predicated region
    $region14: #{tpu_custom_call.1} parent=1 // pred_check
      _
    $region15: #{tpu_custom_call.1} parent=1 // pred_check_branch
      %26 = sbr.rel (0) target = $region17
    $region16: #{tpu_custom_call.1} parent=1 // pred_region
      _
    $region17: #{tpu_custom_call.1} parent=1 // pred_fallthru
      _
    // Predicated region
    $region18: #{tpu_custom_call.1} parent=1 // pred_check
      _
    $region19: #{tpu_custom_call.1} parent=1 // pred_check_branch
      %28 = sbr.rel (0) target = $region21
    $region20: #{tpu_custom_call.1} parent=1 // pred_region
      _
    $region21: #{tpu_custom_call.1} parent=1 // pred_fallthru
      _
    // Predicated region
    $region22: #{tpu_custom_call.1} parent=1 // pred_check
      _
    $region23: #{tpu_custom_call.1} parent=1 // pred_check_branch
      %30 = sbr.rel (0) target = $region25
    $region24: #{tpu_custom_call.1} parent=1 // pred_region
      _
    $region25: #{tpu_custom_call.1} parent=1 // pred_fallthru
      _
    // Predicated region
    $region26: #{tpu_custom_call.1} parent=1 // pred_check
      _
    $region27: #{tpu_custom_call.1} parent=1 // pred_check_branch
      %32 = sbr.rel (0) target = $region29
    $region28: #{tpu_custom_call.1} parent=1 // pred_region
      _
    $region29: #{tpu_custom_call.1} parent=1 // pred_fallthru
      _
    // Predicated region
    $region30: #{tpu_custom_call.1} parent=1 // pred_check
      _
    $region31: #{tpu_custom_call.1} parent=1 // pred_check_branch
      %34 = sbr.rel (0) target = $region33
    $region32: #{tpu_custom_call.1} parent=1 // pred_region
      _
    $region33: #{tpu_custom_call.1} parent=1 // pred_fallthru
      _
    // Predicated region
    $region34: #{tpu_custom_call.1} parent=1 // pred_check
      _
    $region35: #{tpu_custom_call.1} parent=1 // pred_check_branch
      %36 = sbr.rel (0) target = $region37
    $region36: #{tpu_custom_call.1} parent=1 // pred_region
      _
    $region37: #{tpu_custom_call.1} parent=1 // pred_fallthru
      _
    // Predicated region
    $region38: #{tpu_custom_call.1} parent=1 // pred_check
      _
    $region39: #{tpu_custom_call.1} parent=1 // pred_check_branch
      %38 = sbr.rel (0) target = $region41
    $region40: #{tpu_custom_call.1} parent=1 // pred_region
      _
    $region41: #{tpu_custom_call.1} parent=1 // pred_fallthru
      _
    %v40 = vld [vmem:[%s0] sm:$0xff]
    %v41 = vld [vmem:[%s0 + $0x8] sm:$0xff]
    %v42 = vld [vmem:[%s0 + $0x10] sm:$0xff]
    %v43 = vld [vmem:[%s0 + $0x18] sm:$0xf]
    %v44 = vld [vmem:[%s2] sm:$0xf]
    %v45 = vld [vmem:[%s2 + $0x4] sm:$0xf]
    %v46 = vld [vmem:[%s2 + $0x8] sm:$0xf]
    %v47 = vld [vmem:[%s2 + $0xc] sm:$0xf]
    %v48 = vld [vmem:[%s2 + $0x10] sm:$0xf]
    %v49 = vld [vmem:[%s2 + $0x14] sm:$0xf]
    %v50 = vld [vmem:[%s2 + $0x18] sm:$0xf]
    %v51 = vld [vmem:[%s2 + $0x1c] sm:$0xf]
    %v52 = vld [vmem:[%s2 + $0x20] sm:$0xf]
    %v53 = vld [vmem:[%s2 + $0x24] sm:$0xf]
    %v54 = vld [vmem:[%s2 + $0x28] sm:$0xf]
    %v55 = vld [vmem:[%s2 + $0x2c] sm:$0xf]
    %v56 = vld [vmem:[%s2 + $0x30] sm:$0xf]
    %v57 = vld [vmem:[%s2 + $0x34] sm:$0xf]
    %v58 = vld [vmem:[%s2 + $0x38] sm:$0xf]
    %v59 = vld [vmem:[%s2 + $0x3c] sm:$0xf]
    %v60 = vld [vmem:[%s2 + $0x40] sm:$0xf]
    %v61 = vld [vmem:[%s2 + $0x44] sm:$0xf]
    %v62 = vld [vmem:[%s2 + $0x48] sm:$0xf]
    %v63 = vld [vmem:[%s2 + $0x4c] sm:$0xf]
    %v64 = vld [vmem:[%s2 + $0x50] sm:$0xf]
    %v65 = vld [vmem:[%s2 + $0x54] sm:$0xf]
    %v66 = vld [vmem:[%s2 + $0x58] sm:$0xf]
    %v67 = vld [vmem:[%s2 + $0x5c] sm:$0xf]
    %v68 = vld [vmem:[%s2 + $0x60] sm:$0xf]
    %v69 = vld [vmem:[%s2 + $0x64] sm:$0xf]
    %v70 = vld [vmem:[%s2 + $0x68] sm:$0xf]
    %v71 = vld [vmem:[%s2 + $0x6c] sm:$0xf]
    %v72 = vld [vmem:[%s2 + $0x70] sm:$0xf]
    %v73 = vld [vmem:[%s2 + $0x74] sm:$0xf]
    %v74 = vld [vmem:[%s2 + $0x78] sm:$0xf]
    %v75 = vld [vmem:[%s2 + $0x7c] sm:$0xf]
    %v76 = vld [vmem:[%s2 + $0x80] sm:$0xf]
    %v77 = vld [vmem:[%s2 + $0x84] sm:$0xf]
    %v78 = vld [vmem:[%s2 + $0x88] sm:$0xf]
    %v79 = vld [vmem:[%s2 + $0x8c] sm:$0xf]
    %v80 = vld [vmem:[%s2 + $0x90] sm:$0xf]
    %v81 = vld [vmem:[%s2 + $0x94] sm:$0xf]
    %v82 = vld [vmem:[%s2 + $0x98] sm:$0xf]
    %v83 = vld [vmem:[%s2 + $0x9c] sm:$0xf]
    %v84 = vld [vmem:[%s2 + $0xa0] sm:$0xf]
    %v85 = vld [vmem:[%s2 + $0xa4] sm:$0xf]
    %v86 = vld [vmem:[%s2 + $0xa8] sm:$0xf]
    %v87 = vld [vmem:[%s2 + $0xac] sm:$0xf]
    %v88 = vld [vmem:[%s2 + $0xb0] sm:$0xf]
    %v89 = vld [vmem:[%s2 + $0xb4] sm:$0xf]
    %v90 = vld [vmem:[%s2 + $0xb8] sm:$0xf]
    %v91 = vld [vmem:[%s2 + $0xbc] sm:$0xf]
    %v92 = vld [vmem:[%s2 + $0xc0] sm:$0xf]
    %v93 = vld [vmem:[%s2 + $0xc4] sm:$0xf]
    %v94 = vld [vmem:[%s2 + $0xc8] sm:$0xf]
    %v95 = vld [vmem:[%s2 + $0xcc] sm:$0xf]
    %v96 = vld [vmem:[%s2 + $0xd0] sm:$0xf]
    %v97 = vld [vmem:[%s2 + $0xd4] sm:$0xf]
    %v98 = vld [vmem:[%s2 + $0xd8] sm:$0xf]
    %v99 = vld [vmem:[%s2 + $0xdc] sm:$0xf]
    %v100 = vld [vmem:[%s2 + $0xe0] sm:$0xf]
    %v101 = vld [vmem:[%s2 + $0xe4] sm:$0xf]
    %v102 = vld [vmem:[%s2 + $0xe8] sm:$0xf]
    %v103 = vld [vmem:[%s2 + $0xec] sm:$0xf]
    %v104 = vld [vmem:[%s2 + $0xf0] sm:$0xf]
    %v105 = vld [vmem:[%s2 + $0xf4] sm:$0xf]
    %v106 = vld [vmem:[%s2 + $0xf8] sm:$0xf]
    %v107 = vld [vmem:[%s2 + $0xfc] sm:$0xf]
    %v108 = vld [vmem:[%s2 + $0x100] sm:$0xf]
    %v109 = vld [vmem:[%s2 + $0x104] sm:$0xf]
    %v110 = vld [vmem:[%s2 + $0x108] sm:$0xf]
    %v111 = vld [vmem:[%s2 + $0x10c] sm:$0xf]
    %v112 = vld [vmem:[%s2 + $0x110] sm:$0xf]
    %v113 = vld [vmem:[%s2 + $0x114] sm:$0xf]
    %v114 = vld [vmem:[%s2 + $0x118] sm:$0xf]
    %v115 = vld [vmem:[%s2 + $0x11c] sm:$0xf]
    %v116 = vld [vmem:[%s2 + $0x120] sm:$0xf]
    %v117 = vld [vmem:[%s2 + $0x124] sm:$0xf]
    %v118 = vld [vmem:[%s2 + $0x128] sm:$0xf]
    %v119 = vld [vmem:[%s2 + $0x12c] sm:$0xf]
    %v120 = vld [vmem:[%s2 + $0x130] sm:$0xf]
    %v121 = vld [vmem:[%s2 + $0x134] sm:$0xf]
    %v122 = vld [vmem:[%s2 + $0x138] sm:$0xf]
    %v123 = vld [vmem:[%s2 + $0x13c] sm:$0xf]
    %v124 = vld [vmem:[%s2 + $0x140] sm:$0xf]
    %v125 = vld [vmem:[%s2 + $0x144] sm:$0xf]
    %v126 = vld [vmem:[%s2 + $0x148] sm:$0xf]
    %v127 = vld [vmem:[%s2 + $0x14c] sm:$0xf]
    %v128 = vld [vmem:[%s2 + $0x150] sm:$0xf]
    %v129 = vld [vmem:[%s2 + $0x154] sm:$0xf]
    %v130 = vld [vmem:[%s2 + $0x158] sm:$0xf]
    %v131 = vld [vmem:[%s2 + $0x15c] sm:$0xf]
    %v132 = vld [vmem:[%s2 + $0x160] sm:$0xf]
    %v133 = vld [vmem:[%s2 + $0x164] sm:$0xf]
    %v134 = vld [vmem:[%s2 + $0x168] sm:$0xf]
    %v135 = vld [vmem:[%s2 + $0x16c] sm:$0xf]
    %v136 = vld [vmem:[%s2 + $0x170] sm:$0xf]
    %v137 = vld [vmem:[%s2 + $0x174] sm:$0xf]
    %v138 = vld [vmem:[%s2 + $0x178] sm:$0xf]
    %v139 = vld [vmem:[%s2 + $0x17c] sm:$0xf]
    %v140 = vld [vmem:[%s2 + $0x180] sm:$0xf]
    %v141 = vld [vmem:[%s2 + $0x184] sm:$0xf]
    %v142 = vld [vmem:[%s3] sm:$0x1]
    %v144 = vlaneseq
    %v145 = vshrl.u32 %v144, 7
    %v146 = vsub.s32 0, %v145
    %v147 = vrot.slane %v142, %v146
    %v153 = vunpack.c.l.b16 %v40
    %v154 = vunpack.c.h.b16 %v40
    %v155 = vunpack.c.l.b16 %v41
    %v156 = vunpack.c.h.b16 %v41
    %v157 = vunpack.c.l.b16 %v42
    %v158 = vunpack.c.h.b16 %v42
    %v159 = vunpack.c.l.b16 %v43
    %v160 = vpack.c.b16 %v153, %v153
    %v161 = vpack.c.b16 %v154, %v154
    %v162 = vpack.c.b16 %v155, %v155
    %v163 = vpack.c.b16 %v156, %v156
    %v164 = vpack.c.b16 %v157, %v157
    %v165 = vpack.c.b16 %v158, %v158
    %v166 = vpack.c.b16 %v159, %v159
    %v271 = vunpack.c.l.b16 %v44
    %v272 = vunpack.c.l.b16 %v45
    %v273 = vunpack.c.l.b16 %v46
    %v274 = vunpack.c.l.b16 %v47
    %v275 = vunpack.c.l.b16 %v48
    %v276 = vunpack.c.l.b16 %v49
    %v277 = vunpack.c.l.b16 %v50
    %v278 = vunpack.c.l.b16 %v51
    %v279 = vunpack.c.l.b16 %v52
    %v280 = vunpack.c.l.b16 %v53
    %v281 = vunpack.c.l.b16 %v54
    %v282 = vunpack.c.l.b16 %v55
    %v283 = vunpack.c.l.b16 %v56
    %v284 = vunpack.c.l.b16 %v57
    %v285 = vunpack.c.l.b16 %v58
    %v286 = vunpack.c.l.b16 %v59
    %v287 = vunpack.c.l.b16 %v60
    %v288 = vunpack.c.l.b16 %v61
    %v289 = vunpack.c.l.b16 %v62
    %v290 = vunpack.c.l.b16 %v63
    %v291 = vunpack.c.l.b16 %v64
    %v292 = vunpack.c.l.b16 %v65
    %v293 = vunpack.c.l.b16 %v66
    %v294 = vunpack.c.l.b16 %v67
    %v295 = vunpack.c.l.b16 %v68
    %v296 = vunpack.c.l.b16 %v69
    %v297 = vunpack.c.l.b16 %v70
    %v298 = vunpack.c.l.b16 %v71
    %v299 = vunpack.c.l.b16 %v72
    %v300 = vunpack.c.l.b16 %v73
    %v301 = vunpack.c.l.b16 %v74
    %v302 = vunpack.c.l.b16 %v75
    %v303 = vunpack.c.l.b16 %v76
    %v304 = vunpack.c.l.b16 %v77
    %v305 = vunpack.c.l.b16 %v78
    %v306 = vunpack.c.l.b16 %v79
    %v307 = vunpack.c.l.b16 %v80
    %v308 = vunpack.c.l.b16 %v81
    %v309 = vunpack.c.l.b16 %v82
    %v310 = vunpack.c.l.b16 %v83
    %v311 = vunpack.c.l.b16 %v84
    %v312 = vunpack.c.l.b16 %v85
    %v313 = vunpack.c.l.b16 %v86
    %v314 = vunpack.c.l.b16 %v87
    %v315 = vunpack.c.l.b16 %v88
    %v316 = vunpack.c.l.b16 %v89
    %v317 = vunpack.c.l.b16 %v90
    %v318 = vunpack.c.l.b16 %v91
    %v319 = vunpack.c.l.b16 %v92
    %v320 = vunpack.c.l.b16 %v93
    %v321 = vunpack.c.l.b16 %v94
    %v322 = vunpack.c.l.b16 %v95
    %v323 = vunpack.c.l.b16 %v96
    %v324 = vunpack.c.l.b16 %v97
    %v325 = vunpack.c.l.b16 %v98
    %v326 = vunpack.c.l.b16 %v99
    %v327 = vunpack.c.l.b16 %v100
    %v328 = vunpack.c.l.b16 %v101
    %v329 = vunpack.c.l.b16 %v102
    %v330 = vunpack.c.l.b16 %v103
    %v331 = vunpack.c.l.b16 %v104
    %v332 = vunpack.c.l.b16 %v105
    %v333 = vunpack.c.l.b16 %v106
    %v334 = vunpack.c.l.b16 %v107
    %v335 = vunpack.c.l.b16 %v108
    %v336 = vunpack.c.l.b16 %v109
    %v337 = vunpack.c.l.b16 %v110
    %v338 = vunpack.c.l.b16 %v111
    %v339 = vunpack.c.l.b16 %v112
    %v340 = vunpack.c.l.b16 %v113
    %v341 = vunpack.c.l.b16 %v114
    %v342 = vunpack.c.l.b16 %v115
    %v343 = vunpack.c.l.b16 %v116
    %v344 = vunpack.c.l.b16 %v117
    %v345 = vunpack.c.l.b16 %v118
    %v346 = vunpack.c.l.b16 %v119
    %v347 = vunpack.c.l.b16 %v120
    %v348 = vunpack.c.l.b16 %v121
    %v349 = vunpack.c.l.b16 %v122
    %v350 = vunpack.c.l.b16 %v123
    %v351 = vunpack.c.l.b16 %v124
    %v352 = vunpack.c.l.b16 %v125
    %v353 = vunpack.c.l.b16 %v126
    %v354 = vunpack.c.l.b16 %v127
    %v355 = vunpack.c.l.b16 %v128
    %v356 = vunpack.c.l.b16 %v129
    %v357 = vunpack.c.l.b16 %v130
    %v358 = vunpack.c.l.b16 %v131
    %v359 = vunpack.c.l.b16 %v132
    %v360 = vunpack.c.l.b16 %v133
    %v361 = vunpack.c.l.b16 %v134
    %v362 = vunpack.c.l.b16 %v135
    %v363 = vunpack.c.l.b16 %v136
    %v364 = vunpack.c.l.b16 %v137
    %v365 = vunpack.c.l.b16 %v138
    %v366 = vunpack.c.l.b16 %v139
    %v367 = vunpack.c.l.b16 %v140
    %v368 = vunpack.c.l.b16 %v141
    %v369 = vpack.c.b16 %v272, %v271
    %v370 = vpack.c.b16 %v274, %v273
    %v371 = vpack.c.b16 %v276, %v275
    %v372 = vpack.c.b16 %v278, %v277
    %v373 = vpack.c.b16 %v280, %v279
    %v374 = vpack.c.b16 %v282, %v281
    %v375 = vpack.c.b16 %v284, %v283
    %v376 = vpack.c.b16 %v286, %v285
    %v377 = vpack.c.b16 %v288, %v287
    %v378 = vpack.c.b16 %v290, %v289
    %v379 = vpack.c.b16 %v292, %v291
    %v380 = vpack.c.b16 %v294, %v293
    %v381 = vpack.c.b16 %v296, %v295
    %v382 = vpack.c.b16 %v298, %v297
    %v383 = vpack.c.b16 %v300, %v299
    %v384 = vpack.c.b16 %v302, %v301
    %v385 = vpack.c.b16 %v304, %v303
    %v386 = vpack.c.b16 %v306, %v305
    %v387 = vpack.c.b16 %v308, %v307
    %v388 = vpack.c.b16 %v310, %v309
    %v389 = vpack.c.b16 %v312, %v311
    %v390 = vpack.c.b16 %v314, %v313
    %v391 = vpack.c.b16 %v316, %v315
    %v392 = vpack.c.b16 %v318, %v317
    %v393 = vpack.c.b16 %v320, %v319
    %v394 = vpack.c.b16 %v322, %v321
    %v395 = vpack.c.b16 %v324, %v323
    %v396 = vpack.c.b16 %v326, %v325
    %v397 = vpack.c.b16 %v328, %v327
    %v398 = vpack.c.b16 %v330, %v329
    %v399 = vpack.c.b16 %v332, %v331
    %v400 = vpack.c.b16 %v334, %v333
    %v401 = vpack.c.b16 %v336, %v335
    %v402 = vpack.c.b16 %v338, %v337
    %v403 = vpack.c.b16 %v340, %v339
    %v404 = vpack.c.b16 %v342, %v341
    %v405 = vpack.c.b16 %v344, %v343
    %v406 = vpack.c.b16 %v346, %v345
    %v407 = vpack.c.b16 %v348, %v347
    %v408 = vpack.c.b16 %v350, %v349
    %v409 = vpack.c.b16 %v352, %v351
    %v410 = vpack.c.b16 %v354, %v353
    %v411 = vpack.c.b16 %v356, %v355
    %v412 = vpack.c.b16 %v358, %v357
    %v413 = vpack.c.b16 %v360, %v359
    %v414 = vpack.c.b16 %v362, %v361
    %v415 = vpack.c.b16 %v364, %v363
    %v416 = vpack.c.b16 %v366, %v365
    %v417 = vpack.c.b16 %v368, %v367
    %vm467 = vcmask 130048
    %v469 = vsel %vm467, %v166, 0
    %471 = vmatprep.subr.bf16.mxu0 0
    %472 = vmatpush1.bf16.msra.mxu0 %v369
    %473 = vmatprep.subr.bf16.mxu0 0
    %474 = vmatpush1.bf16.msra.mxu0 %v370
    %475 = vmatprep.subr.bf16.mxu0 0
    %476 = vmatpush1.bf16.msra.mxu0 %v371
    %477 = vmatprep.subr.bf16.mxu0 0
    %478 = vmatpush1.bf16.msra.mxu0 %v372
    %479 = vmatprep.subr.bf16.mxu0 0
    %480 = vmatpush1.bf16.msra.mxu0 %v373
    %481 = vmatprep.subr.bf16.mxu0 0
    %482 = vmatpush1.bf16.msra.mxu0 %v374
    %483 = vmatprep.subr.bf16.mxu0 0
    %484 = vmatpush1.bf16.msra.mxu0 %v375
    %485 = vmatprep.subr.bf16.mxu0 0
    %486 = vmatpush1.bf16.msra.mxu0 %v376
    %487 = vmatprep.subr.bf16.mxu0 0
    %488 = vmatpush1.bf16.msra.mxu0 %v377
    %489 = vmatprep.subr.bf16.mxu0 0
    %490 = vmatpush1.bf16.msra.mxu0 %v378
    %491 = vmatprep.subr.bf16.mxu0 0
    %492 = vmatpush1.bf16.msra.mxu0 %v379
    %493 = vmatprep.subr.bf16.mxu0 0
    %494 = vmatpush1.bf16.msra.mxu0 %v380
    %495 = vmatprep.subr.bf16.mxu0 0
    %496 = vmatpush1.bf16.msra.mxu0 %v381
    %497 = vmatprep.subr.bf16.mxu0 0
    %498 = vmatpush1.bf16.msra.mxu0 %v382
    %499 = vmatprep.subr.bf16.mxu0 0
    %500 = vmatpush1.bf16.msra.mxu0 %v383
    %501 = vmatprep.subr.bf16.mxu0 0
    %502 = vmatpush1.bf16.msra.mxu0 %v384
    %503 = vmatprep.mubr.bf16.mxu0 %v161
    %504 = vmatmul.mubr.bf16.gmra.mrb[0].mxu0 %v160
    %v505 = vpop.f32.mrb[0].mxu0
    %v506 = vadd.f32 %v147, %v505
    %v507 = vpop.f32.mrb[0].mxu0
    %v508 = vpop.f32.mrb[0].mxu0
    %v509 = vpop.f32.mrb[0].mxu0
    %510 = vdwg.mxu0
    %511 = vmatprep.subr.bf16.mxu0 0
    %512 = vmatpush1.bf16.msra.mxu0 %v385
    %513 = vmatprep.subr.bf16.mxu0 0
    %514 = vmatpush1.bf16.msra.mxu0 %v386
    %515 = vmatprep.subr.bf16.mxu0 0
    %516 = vmatpush1.bf16.msra.mxu0 %v387
    %517 = vmatprep.subr.bf16.mxu0 0
    %518 = vmatpush1.bf16.msra.mxu0 %v388
    %519 = vmatprep.subr.bf16.mxu0 0
    %520 = vmatpush1.bf16.msra.mxu0 %v389
    %521 = vmatprep.subr.bf16.mxu0 0
    %522 = vmatpush1.bf16.msra.mxu0 %v390
    %523 = vmatprep.subr.bf16.mxu0 0
    %524 = vmatpush1.bf16.msra.mxu0 %v391
    %525 = vmatprep.subr.bf16.mxu0 0
    %526 = vmatpush1.bf16.msra.mxu0 %v392
    %527 = vmatprep.subr.bf16.mxu0 0
    %528 = vmatpush1.bf16.msra.mxu0 %v393
    %529 = vmatprep.subr.bf16.mxu0 0
    %530 = vmatpush1.bf16.msra.mxu0 %v394
    %531 = vmatprep.subr.bf16.mxu0 0
    %532 = vmatpush1.bf16.msra.mxu0 %v395
    %533 = vmatprep.subr.bf16.mxu0 0
    %534 = vmatpush1.bf16.msra.mxu0 %v396
    %535 = vmatprep.subr.bf16.mxu0 0
    %536 = vmatpush1.bf16.msra.mxu0 %v397
    %537 = vmatprep.subr.bf16.mxu0 0
    %538 = vmatpush1.bf16.msra.mxu0 %v398
    %539 = vmatprep.subr.bf16.mxu0 0
    %540 = vmatpush1.bf16.msra.mxu0 %v399
    %541 = vmatprep.subr.bf16.mxu0 0
    %542 = vmatpush1.bf16.msra.mxu0 %v400
    %543 = vmatprep.mubr.bf16.mxu0 %v163
    %544 = vmatmul.mubr.bf16.gmra.mrb[0].mxu0 %v162
    %v545 = vpop.f32.mrb[0].mxu0
    %v546 = vadd.f32 %v506, %v545
    %v547 = vpop.f32.mrb[0].mxu0
    %v548 = vpop.f32.mrb[0].mxu0
    %v549 = vpop.f32.mrb[0].mxu0
    %550 = vdwg.mxu0
    %551 = vmatprep.subr.bf16.mxu0 0
    %552 = vmatpush1.bf16.msra.mxu0 %v401
    %553 = vmatprep.subr.bf16.mxu0 0
    %554 = vmatpush1.bf16.msra.mxu0 %v402
    %555 = vmatprep.subr.bf16.mxu0 0
    %556 = vmatpush1.bf16.msra.mxu0 %v403
    %557 = vmatprep.subr.bf16.mxu0 0
    %558 = vmatpush1.bf16.msra.mxu0 %v404
    %559 = vmatprep.subr.bf16.mxu0 0
    %560 = vmatpush1.bf16.msra.mxu0 %v405
    %561 = vmatprep.subr.bf16.mxu0 0
    %562 = vmatpush1.bf16.msra.mxu0 %v406
    %563 = vmatprep.subr.bf16.mxu0 0
    %564 = vmatpush1.bf16.msra.mxu0 %v407
    %565 = vmatprep.subr.bf16.mxu0 0
    %566 = vmatpush1.bf16.msra.mxu0 %v408
    %567 = vmatprep.subr.bf16.mxu0 0
    %568 = vmatpush1.bf16.msra.mxu0 %v409
    %569 = vmatprep.subr.bf16.mxu0 0
    %570 = vmatpush1.bf16.msra.mxu0 %v410
    %571 = vmatprep.subr.bf16.mxu0 0
    %572 = vmatpush1.bf16.msra.mxu0 %v411
    %573 = vmatprep.subr.bf16.mxu0 0
    %574 = vmatpush1.bf16.msra.mxu0 %v412
    %575 = vmatprep.subr.bf16.mxu0 0
    %576 = vmatpush1.bf16.msra.mxu0 %v413
    %577 = vmatprep.subr.bf16.mxu0 0
    %578 = vmatpush1.bf16.msra.mxu0 %v414
    %579 = vmatprep.subr.bf16.mxu0 0
    %580 = vmatpush1.bf16.msra.mxu0 %v415
    %581 = vmatprep.subr.bf16.mxu0 0
    %582 = vmatpush1.bf16.msra.mxu0 %v416
    %583 = vmatprep.mubr.bf16.mxu0 %v165
    %584 = vmatmul.mubr.bf16.gmra.mrb[0].mxu0 %v164
    %v585 = vpop.f32.mrb[0].mxu0
    %v586 = vadd.f32 %v546, %v585
    %v587 = vpop.f32.mrb[0].mxu0
    %v588 = vpop.f32.mrb[0].mxu0
    %v589 = vpop.f32.mrb[0].mxu0
    %590 = vdwg.mxu0
    %591 = vmatprep.subr.bf16.mxu0 0
    %592 = vmatpush1.bf16.msra.mxu0 %v417
    %593 = vmatprep.subr.bf16.mxu0 0
    %594 = vmatpush1.bf16.msra.mxu0 0
    %595 = vmatprep.subr.bf16.mxu0 0
    %596 = vmatpush1.bf16.msra.mxu0 0
    %597 = vmatprep.subr.bf16.mxu0 0
    %598 = vmatpush1.bf16.msra.mxu0 0
    %599 = vmatprep.subr.bf16.mxu0 0
    %600 = vmatpush1.bf16.msra.mxu0 0
    %601 = vmatprep.subr.bf16.mxu0 0
    %602 = vmatpush1.bf16.msra.mxu0 0
    %603 = vmatprep.subr.bf16.mxu0 0
    %604 = vmatpush1.bf16.msra.mxu0 0
    %605 = vmatprep.subr.bf16.mxu0 0
    %606 = vmatpush1.bf16.msra.mxu0 0
    %607 = vmatprep.subr.bf16.mxu0 0
    %608 = vmatpush1.bf16.msra.mxu0 0
    %609 = vmatprep.subr.bf16.mxu0 0
    %610 = vmatpush1.bf16.msra.mxu0 0
    %611 = vmatprep.subr.bf16.mxu0 0
    %612 = vmatpush1.bf16.msra.mxu0 0
    %613 = vmatprep.subr.bf16.mxu0 0
    %614 = vmatpush1.bf16.msra.mxu0 0
    %615 = vmatprep.subr.bf16.mxu0 0
    %616 = vmatpush1.bf16.msra.mxu0 0
    %617 = vmatprep.subr.bf16.mxu0 0
    %618 = vmatpush1.bf16.msra.mxu0 0
    %619 = vmatprep.subr.bf16.mxu0 0
    %620 = vmatpush1.bf16.msra.mxu0 0
    %621 = vmatprep.subr.bf16.mxu0 0
    %622 = vmatpush1.bf16.msra.mxu0 0
    %623 = vmatprep.mubr.bf16.mxu0 0
    %624 = vmatmul.mubr.bf16.gmra.mrb[0].mxu0 %v469
    %v625 = vpop.f32.mrb[0].mxu0
    %v626 = vadd.f32 %v586, %v625
    %v627 = vpop.f32.mrb[0].mxu0
    %v628 = vpop.f32.mrb[0].mxu0
    %v629 = vpop.f32.mrb[0].mxu0
    %630 = vdwg.mxu0
    %v631 = vmax.f32 %v626, 0.0
    %v632 = vpack.c.bf16 %v631, %v631
    %v633 = vld [vmem:[%s4] sm:$0xf]
    %v634 = vld [vmem:[%s4 + $0x4] sm:$0xf]
    %v635 = vld [vmem:[%s4 + $0x8] sm:$0xf]
    %v636 = vld [vmem:[%s4 + $0xc] sm:$0xf]
    %v637 = vld [vmem:[%s4 + $0x10] sm:$0xf]
    %v638 = vld [vmem:[%s4 + $0x14] sm:$0xf]
    %v639 = vld [vmem:[%s4 + $0x18] sm:$0x1]
    %v640 = vld [vmem:[%s5] sm:$0x1]
    %v642 = vlaneseq
    %v643 = vshrl.u32 %v642, 7
    %v644 = vsub.s32 0, %v643
    %v645 = vrot.slane %v640, %v644
    %v654 = vunpack.c.l.b16 %v633
    %v655 = vunpack.c.l.b16 %v634
    %v656 = vunpack.c.l.b16 %v635
    %v657 = vunpack.c.l.b16 %v636
    %v658 = vunpack.c.l.b16 %v637
    %v659 = vunpack.c.l.b16 %v638
    %v660 = vunpack.c.l.b16 %v639
    %v661 = vpack.c.b16 %v655, %v654
    %v662 = vpack.c.b16 %v657, %v656
    %v663 = vpack.c.b16 %v659, %v658
    %v664 = vpack.c.b16 %v660, %v660
    %vm668 = vcmask 408576
    %v670 = vsel %vm668, %v632, 0
    %vm672 = vcmask 1040384
    %v674 = vsel %vm672, %v664, 0
    %676 = vmatprep.subr.bf16.mxu0 0
    %677 = vmatpush1.bf16.msra.mxu0 %v661
    %678 = vmatprep.subr.bf16.mxu0 0
    %679 = vmatpush1.bf16.msra.mxu0 %v662
    %680 = vmatprep.subr.bf16.mxu0 0
    %681 = vmatpush1.bf16.msra.mxu0 %v663
    %682 = vmatprep.subr.bf16.mxu0 0
    %683 = vmatpush1.bf16.msra.mxu0 %v674
    %684 = vmatprep.subr.bf16.mxu0 0
    %685 = vmatpush1.bf16.msra.mxu0 0
    %686 = vmatprep.subr.bf16.mxu0 0
    %687 = vmatpush1.bf16.msra.mxu0 0
    %688 = vmatprep.subr.bf16.mxu0 0
    %689 = vmatpush1.bf16.msra.mxu0 0
    %690 = vmatprep.subr.bf16.mxu0 0
    %691 = vmatpush1.bf16.msra.mxu0 0
    %692 = vmatprep.subr.bf16.mxu0 0
    %693 = vmatpush1.bf16.msra.mxu0 0
    %694 = vmatprep.subr.bf16.mxu0 0
    %695 = vmatpush1.bf16.msra.mxu0 0
    %696 = vmatprep.subr.bf16.mxu0 0
    %697 = vmatpush1.bf16.msra.mxu0 0
    %698 = vmatprep.subr.bf16.mxu0 0
    %699 = vmatpush1.bf16.msra.mxu0 0
    %700 = vmatprep.subr.bf16.mxu0 0
    %701 = vmatpush1.bf16.msra.mxu0 0
    %702 = vmatprep.subr.bf16.mxu0 0
    %703 = vmatpush1.bf16.msra.mxu0 0
    %704 = vmatprep.subr.bf16.mxu0 0
    %705 = vmatpush1.bf16.msra.mxu0 0
    %706 = vmatprep.subr.bf16.mxu0 0
    %707 = vmatpush1.bf16.msra.mxu0 0
    %708 = vmatprep.mubr.bf16.mxu0 0
    %709 = vmatmul.mubr.bf16.gmra.mrb[0].mxu0 %v670
    %v710 = vpop.f32.mrb[0].mxu0
    %v711 = vadd.f32 %v645, %v710
    %v712 = vpop.f32.mrb[0].mxu0
    %v713 = vpop.f32.mrb[0].mxu0
    %v714 = vpop.f32.mrb[0].mxu0
    %715 = vdwg.mxu0
    %716 = vst [vmem:[#allocation4] sm:$0xff] %v711
    %v717 = vld [vmem:[%s1] sm:$0xff]
    %v718 = vmul.f32 %v711, 0.5
    %v719 = vmul.f32 %v718, 1.442695
    %v720 = vpow.pop %v719
    %722 = vrot.lane.b32.xlu0 %v720, 123
    %v723 = vpop.permute.xlu0 %722
    %v725 = vmul.f32 %v717, %v723
    %v726 = vadd.f32 %v725, %v711
    %v727 = vpack.c.bf16 %v726, %v726
    %v728 = vld [vmem:[%s6] sm:$0x7]
    %v729 = vld [vmem:[%s7] sm:$0x1]
    %v731 = vlaneseq
    %v732 = vshrl.u32 %v731, 7
    %v733 = vsub.s32 0, %v732
    %v734 = vrot.slane %v729, %v733
    %vm736 = vcmask 39936
    %v738 = vsel %vm736, %v727, 0
    %vm740 = vcmask 1041408
    %vm741 = vcmask 1042432
    %v742 = vsel %vm740, 4294967295, 65535
    %v743 = vsel %vm741, %v742, 0
    %v745 = vand.u32 %v728, %v743
    %747 = vmatprep.subr.bf16.mxu0 0
    %748 = vmatpush1.bf16.msra.mxu0 %v745
    %749 = vmatprep.subr.bf16.mxu0 0
    %750 = vmatpush1.bf16.msra.mxu0 0
    %751 = vmatprep.subr.bf16.mxu0 0
    %752 = vmatpush1.bf16.msra.mxu0 0
    %753 = vmatprep.subr.bf16.mxu0 0
    %754 = vmatpush1.bf16.msra.mxu0 0
    %755 = vmatprep.subr.bf16.mxu0 0
    %756 = vmatpush1.bf16.msra.mxu0 0
    %757 = vmatprep.subr.bf16.mxu0 0
    %758 = vmatpush1.bf16.msra.mxu0 0
    %759 = vmatprep.subr.bf16.mxu0 0
    %760 = vmatpush1.bf16.msra.mxu0 0
    %761 = vmatprep.subr.bf16.mxu0 0
    %762 = vmatpush1.bf16.msra.mxu0 0
    %763 = vmatprep.subr.bf16.mxu0 0
    %764 = vmatpush1.bf16.msra.mxu0 0
    %765 = vmatprep.subr.bf16.mxu0 0
    %766 = vmatpush1.bf16.msra.mxu0 0
    %767 = vmatprep.subr.bf16.mxu0 0
    %768 = vmatpush1.bf16.msra.mxu0 0
    %769 = vmatprep.subr.bf16.mxu0 0
    %770 = vmatpush1.bf16.msra.mxu0 0
    %771 = vmatprep.subr.bf16.mxu0 0
    %772 = vmatpush1.bf16.msra.mxu0 0
    %773 = vmatprep.subr.bf16.mxu0 0
    %774 = vmatpush1.bf16.msra.mxu0 0
    %775 = vmatprep.subr.bf16.mxu0 0
    %776 = vmatpush1.bf16.msra.mxu0 0
    %777 = vmatprep.subr.bf16.mxu0 0
    %778 = vmatpush1.bf16.msra.mxu0 0
    %779 = vmatprep.mubr.bf16.mxu0 0
    %780 = vmatmul.mubr.bf16.gmra.mrb[0].mxu0 %v738
    %v781 = vpop.f32.mrb[0].mxu0
    %v782 = vadd.f32 %v734, %v781
    %v783 = vpop.f32.mrb[0].mxu0
    %v784 = vpop.f32.mrb[0].mxu0
    %v785 = vpop.f32.mrb[0].mxu0
    %786 = vdwg.mxu0
    %v787 = vmax.f32 %v782, 0.0
    %v788 = vpack.c.bf16 %v787, %v787
    %v789 = vld [vmem:[%s8] sm:$0xff]
    %v790 = vld [vmem:[%s8 + $0x8] sm:$0xff]
    %v791 = vld [vmem:[%s8 + $0x10] sm:$0xff]
    %v792 = vld [vmem:[%s8 + $0x18] sm:$0xf]
    %v793 = vld [vmem:[%s8 + $0x1c] sm:$0xff]
    %v794 = vld [vmem:[%s8 + $0x24] sm:$0xff]
    %v795 = vld [vmem:[%s8 + $0x2c] sm:$0xff]
    %v796 = vld [vmem:[%s8 + $0x34] sm:$0xf]
    %v797 = vld [vmem:[%s8 + $0x38] sm:$0xff]
    %v798 = vld [vmem:[%s8 + $0x40] sm:$0xff]
    %v799 = vld [vmem:[%s8 + $0x48] sm:$0xff]
    %v800 = vld [vmem:[%s8 + $0x50] sm:$0xf]
    %v801 = vld [vmem:[%s8 + $0x54] sm:$0xff]
    %v802 = vld [vmem:[%s8 + $0x5c] sm:$0xff]
    %v803 = vld [vmem:[%s8 + $0x64] sm:$0xff]
    %v804 = vld [vmem:[%s8 + $0x6c] sm:$0xf]
    %v805 = vld [vmem:[%s8 + $0x70] sm:$0xff]
    %v806 = vld [vmem:[%s8 + $0x78] sm:$0xff]
    %v807 = vld [vmem:[%s8 + $0x80] sm:$0xff]
    %v808 = vld [vmem:[%s8 + $0x88] sm:$0xf]
    %v809 = vld [vmem:[%s8 + $0x8c] sm:$0xff]
    %v810 = vld [vmem:[%s8 + $0x94] sm:$0xff]
    %v811 = vld [vmem:[%s8 + $0x9c] sm:$0xff]
    %v812 = vld [vmem:[%s8 + $0xa4] sm:$0xf]
    %v813 = vld [vmem:[%s8 + $0xa8] sm:$0x11]
    %v814 = vld [vmem:[%s8 + $0xb0] sm:$0x11]
    %v815 = vld [vmem:[%s8 + $0xb8] sm:$0x11]
    %v816 = vld [vmem:[%s8 + $0xc0] sm:$0x1]
    %v817 = vld [vmem:[%s9] sm:$0x7f]
    %v819 = vlaneseq
    %v820 = vshrl.u32 %v819, 7
    %v821 = vsub.s32 0, %v820
    %v822 = vrot.slane %v817, %v821
    %v823 = vlaneseq
    %v824 = vshrl.u32 %v823, 7
    %v825 = vsub.s32 1, %v824
    %v826 = vrot.slane %v817, %v825
    %v827 = vlaneseq
    %v828 = vshrl.u32 %v827, 7
    %v829 = vsub.s32 2, %v828
    %v830 = vrot.slane %v817, %v829
    %v831 = vlaneseq
    %v832 = vshrl.u32 %v831, 7
    %v833 = vsub.s32 3, %v832
    %v834 = vrot.slane %v817, %v833
    %v835 = vlaneseq
    %v836 = vshrl.u32 %v835, 7
    %v837 = vsub.s32 4, %v836
    %v838 = vrot.slane %v817, %v837
    %v839 = vlaneseq
    %v840 = vshrl.u32 %v839, 7
    %v841 = vsub.s32 5, %v840
    %v842 = vrot.slane %v817, %v841
    %v843 = vlaneseq
    %v844 = vshrl.u32 %v843, 7
    %v845 = vsub.s32 6, %v844
    %v846 = vrot.slane %v817, %v845
    %v882 = vunpack.c.l.b16 %v789
    %v883 = vunpack.c.h.b16 %v789
    %v884 = vunpack.c.l.b16 %v790
    %v885 = vunpack.c.h.b16 %v790
    %v886 = vunpack.c.l.b16 %v791
    %v887 = vunpack.c.h.b16 %v791
    %v888 = vunpack.c.l.b16 %v792
    %v889 = vunpack.c.l.b16 %v793
    %v890 = vunpack.c.h.b16 %v793
    %v891 = vunpack.c.l.b16 %v794
    %v892 = vunpack.c.h.b16 %v794
    %v893 = vunpack.c.l.b16 %v795
    %v894 = vunpack.c.h.b16 %v795
    %v895 = vunpack.c.l.b16 %v796
    %v896 = vunpack.c.l.b16 %v797
    %v897 = vunpack.c.h.b16 %v797
    %v898 = vunpack.c.l.b16 %v798
    %v899 = vunpack.c.h.b16 %v798
    %v900 = vunpack.c.l.b16 %v799
    %v901 = vunpack.c.h.b16 %v799
    %v902 = vunpack.c.l.b16 %v800
    %v903 = vunpack.c.l.b16 %v801
    %v904 = vunpack.c.h.b16 %v801
    %v905 = vunpack.c.l.b16 %v802
    %v906 = vunpack.c.h.b16 %v802
    %v907 = vunpack.c.l.b16 %v803
    %v908 = vunpack.c.h.b16 %v803
    %v909 = vunpack.c.l.b16 %v804
    %v910 = vunpack.c.l.b16 %v805
    %v911 = vunpack.c.h.b16 %v805
    %v912 = vunpack.c.l.b16 %v806
    %v913 = vunpack.c.h.b16 %v806
    %v914 = vunpack.c.l.b16 %v807
    %v915 = vunpack.c.h.b16 %v807
    %v916 = vunpack.c.l.b16 %v808
    %v917 = vunpack.c.l.b16 %v809
    %v918 = vunpack.c.h.b16 %v809
    %v919 = vunpack.c.l.b16 %v810
    %v920 = vunpack.c.h.b16 %v810
    %v921 = vunpack.c.l.b16 %v811
    %v922 = vunpack.c.h.b16 %v811
    %v923 = vunpack.c.l.b16 %v812
    %v924 = vunpack.c.l.b16 %v813
    %v925 = vunpack.c.h.b16 %v813
    %v926 = vunpack.c.l.b16 %v814
    %v927 = vunpack.c.h.b16 %v814
    %v928 = vunpack.c.l.b16 %v815
    %v929 = vunpack.c.h.b16 %v815
    %v930 = vunpack.c.l.b16 %v816
    %v931 = vpack.c.b16 %v889, %v882
    %v932 = vpack.c.b16 %v890, %v883
    %v933 = vpack.c.b16 %v891, %v884
    %v934 = vpack.c.b16 %v892, %v885
    %v935 = vpack.c.b16 %v893, %v886
    %v936 = vpack.c.b16 %v894, %v887
    %v937 = vpack.c.b16 %v895, %v888
    %v938 = vpack.c.b16 %v903, %v896
    %v939 = vpack.c.b16 %v904, %v897
    %v940 = vpack.c.b16 %v905, %v898
    %v941 = vpack.c.b16 %v906, %v899
    %v942 = vpack.c.b16 %v907, %v900
    %v943 = vpack.c.b16 %v908, %v901
    %v944 = vpack.c.b16 %v909, %v902
    %v945 = vpack.c.b16 %v917, %v910
    %v946 = vpack.c.b16 %v918, %v911
    %v947 = vpack.c.b16 %v919, %v912
    %v948 = vpack.c.b16 %v920, %v913
    %v949 = vpack.c.b16 %v921, %v914
    %v950 = vpack.c.b16 %v922, %v915
    %v951 = vpack.c.b16 %v923, %v916
    %v952 = vpack.c.b16 %v924, %v924
    %v953 = vpack.c.b16 %v925, %v925
    %v954 = vpack.c.b16 %v926, %v926
    %v955 = vpack.c.b16 %v927, %v927
    %v956 = vpack.c.b16 %v928, %v928
    %v957 = vpack.c.b16 %v929, %v929
    %v958 = vpack.c.b16 %v930, %v930
    %v981 = vsel %vm668, %v788, 0
    %v984 = vsel %vm672, %v952, 0
    %v987 = vsel %vm672, %v953, 0
    %v990 = vsel %vm672, %v954, 0
    %v993 = vsel %vm672, %v955, 0
    %v996 = vsel %vm672, %v956, 0
    %v999 = vsel %vm672, %v957, 0
    %v1002 = vsel %vm672, %v958, 0
    %1004 = vmatprep.subr.bf16.mxu0 %v932
    %1005 = vmatpush1.bf16.msra.mxu0 %v931
    %1006 = vmatprep.subr.bf16.mxu0 %v939
    %1007 = vmatpush1.bf16.msra.mxu0 %v938
    %1008 = vmatprep.subr.bf16.mxu0 %v946
    %1009 = vmatpush1.bf16.msra.mxu0 %v945
    %1010 = vmatprep.subr.bf16.mxu0 %v987
    %1011 = vmatpush1.bf16.msra.mxu0 %v984
    %1012 = vmatprep.subr.bf16.mxu0 0
    %1013 = vmatpush1.bf16.msra.mxu0 0
    %1014 = vmatprep.subr.bf16.mxu0 0
    %1015 = vmatpush1.bf16.msra.mxu0 0
    %1016 = vmatprep.subr.bf16.mxu0 0
    %1017 = vmatpush1.bf16.msra.mxu0 0
    %1018 = vmatprep.subr.bf16.mxu0 0
    %1019 = vmatpush1.bf16.msra.mxu0 0
    %1020 = vmatprep.subr.bf16.mxu0 0
    %1021 = vmatpush1.bf16.msra.mxu0 0
    %1022 = vmatprep.subr.bf16.mxu0 0
    %1023 = vmatpush1.bf16.msra.mxu0 0
    %1024 = vmatprep.subr.bf16.mxu0 0
    %1025 = vmatpush1.bf16.msra.mxu0 0
    %1026 = vmatprep.subr.bf16.mxu0 0
    %1027 = vmatpush1.bf16.msra.mxu0 0
    %1028 = vmatprep.subr.bf16.mxu0 0
    %1029 = vmatpush1.bf16.msra.mxu0 0
    %1030 = vmatprep.subr.bf16.mxu0 0
    %1031 = vmatpush1.bf16.msra.mxu0 0
    %1032 = vmatprep.subr.bf16.mxu0 0
    %1033 = vmatpush1.bf16.msra.mxu0 0
    %1034 = vmatprep.subr.bf16.mxu0 0
    %1035 = vmatpush1.bf16.msra.mxu0 0
    %1036 = vmatprep.mubr.bf16.mxu0 0
    %1037 = vmatmul.mubr.bf16.gmra.mrb[0].mxu0 %v981
    %v1038 = vpop.f32.mrb[0].mxu0
    %v1039 = vadd.f32 %v822, %v1038
    %v1040 = vpop.f32.mrb[0].mxu0
    %v1041 = vadd.f32 %v826, %v1040
    %v1042 = vpop.f32.mrb[0].mxu0
    %v1043 = vpop.f32.mrb[0].mxu0
    %1044 = vdwg.mxu0
    %1045 = vmatprep.subr.bf16.mxu0 %v934
    %1046 = vmatpush1.bf16.msra.mxu0 %v933
    %1047 = vmatprep.subr.bf16.mxu0 %v941
    %1048 = vmatpush1.bf16.msra.mxu0 %v940
    %1049 = vmatprep.subr.bf16.mxu0 %v948
    %1050 = vmatpush1.bf16.msra.mxu0 %v947
    %1051 = vmatprep.subr.bf16.mxu0 %v993
    %1052 = vmatpush1.bf16.msra.mxu0 %v990
    %1053 = vmatprep.subr.bf16.mxu0 0
    %1054 = vmatpush1.bf16.msra.mxu0 0
    %1055 = vmatprep.subr.bf16.mxu0 0
    %1056 = vmatpush1.bf16.msra.mxu0 0
    %1057 = vmatprep.subr.bf16.mxu0 0
    %1058 = vmatpush1.bf16.msra.mxu0 0
    %1059 = vmatprep.subr.bf16.mxu0 0
    %1060 = vmatpush1.bf16.msra.mxu0 0
    %1061 = vmatprep.subr.bf16.mxu0 0
    %1062 = vmatpush1.bf16.msra.mxu0 0
    %1063 = vmatprep.subr.bf16.mxu0 0
    %1064 = vmatpush1.bf16.msra.mxu0 0
    %1065 = vmatprep.subr.bf16.mxu0 0
    %1066 = vmatpush1.bf16.msra.mxu0 0
    %1067 = vmatprep.subr.bf16.mxu0 0
    %1068 = vmatpush1.bf16.msra.mxu0 0
    %1069 = vmatprep.subr.bf16.mxu0 0
    %1070 = vmatpush1.bf16.msra.mxu0 0
    %1071 = vmatprep.subr.bf16.mxu0 0
    %1072 = vmatpush1.bf16.msra.mxu0 0
    %1073 = vmatprep.subr.bf16.mxu0 0
    %1074 = vmatpush1.bf16.msra.mxu0 0
    %1075 = vmatprep.subr.bf16.mxu0 0
    %1076 = vmatpush1.bf16.msra.mxu0 0
    %1077 = vmatprep.mubr.bf16.mxu0 0
    %1078 = vmatmul.mubr.bf16.gmra.mrb[0].mxu0 %v981
    %v1079 = vpop.f32.mrb[0].mxu0
    %v1080 = vadd.f32 %v830, %v1079
    %v1081 = vpop.f32.mrb[0].mxu0
    %v1082 = vadd.f32 %v834, %v1081
    %v1083 = vpop.f32.mrb[0].mxu0
    %v1084 = vpop.f32.mrb[0].mxu0
    %1085 = vdwg.mxu0
    %1086 = vmatprep.subr.bf16.mxu0 %v936
    %1087 = vmatpush1.bf16.msra.mxu0 %v935
    %1088 = vmatprep.subr.bf16.mxu0 %v943
    %1089 = vmatpush1.bf16.msra.mxu0 %v942
    %1090 = vmatprep.subr.bf16.mxu0 %v950
    %1091 = vmatpush1.bf16.msra.mxu0 %v949
    %1092 = vmatprep.subr.bf16.mxu0 %v999
    %1093 = vmatpush1.bf16.msra.mxu0 %v996
    %1094 = vmatprep.subr.bf16.mxu0 0
    %1095 = vmatpush1.bf16.msra.mxu0 0
    %1096 = vmatprep.subr.bf16.mxu0 0
    %1097 = vmatpush1.bf16.msra.mxu0 0
    %1098 = vmatprep.subr.bf16.mxu0 0
    %1099 = vmatpush1.bf16.msra.mxu0 0
    %1100 = vmatprep.subr.bf16.mxu0 0
    %1101 = vmatpush1.bf16.msra.mxu0 0
    %1102 = vmatprep.subr.bf16.mxu0 0
    %1103 = vmatpush1.bf16.msra.mxu0 0
    %1104 = vmatprep.subr.bf16.mxu0 0
    %1105 = vmatpush1.bf16.msra.mxu0 0
    %1106 = vmatprep.subr.bf16.mxu0 0
    %1107 = vmatpush1.bf16.msra.mxu0 0
    %1108 = vmatprep.subr.bf16.mxu0 0
    %1109 = vmatpush1.bf16.msra.mxu0 0
    %1110 = vmatprep.subr.bf16.mxu0 0
    %1111 = vmatpush1.bf16.msra.mxu0 0
    %1112 = vmatprep.subr.bf16.mxu0 0
    %1113 = vmatpush1.bf16.msra.mxu0 0
    %1114 = vmatprep.subr.bf16.mxu0 0
    %1115 = vmatpush1.bf16.msra.mxu0 0
    %1116 = vmatprep.subr.bf16.mxu0 0
    %1117 = vmatpush1.bf16.msra.mxu0 0
    %1118 = vmatprep.mubr.bf16.mxu0 0
    %1119 = vmatmul.mubr.bf16.gmra.mrb[0].mxu0 %v981
    %v1120 = vpop.f32.mrb[0].mxu0
    %v1121 = vadd.f32 %v838, %v1120
    %v1122 = vpop.f32.mrb[0].mxu0
    %v1123 = vadd.f32 %v842, %v1122
    %v1124 = vpop.f32.mrb[0].mxu0
    %v1125 = vpop.f32.mrb[0].mxu0
    %1126 = vdwg.mxu0
    %1127 = vmatprep.subr.bf16.mxu0 0
    %1128 = vmatpush1.bf16.msra.mxu0 %v937
    %1129 = vmatprep.subr.bf16.mxu0 0
    %1130 = vmatpush1.bf16.msra.mxu0 %v944
    %1131 = vmatprep.subr.bf16.mxu0 0
    %1132 = vmatpush1.bf16.msra.mxu0 %v951
    %1133 = vmatprep.subr.bf16.mxu0 0
    %1134 = vmatpush1.bf16.msra.mxu0 %v1002
    %1135 = vmatprep.subr.bf16.mxu0 0
    %1136 = vmatpush1.bf16.msra.mxu0 0
    %1137 = vmatprep.subr.bf16.mxu0 0
    %1138 = vmatpush1.bf16.msra.mxu0 0
    %1139 = vmatprep.subr.bf16.mxu0 0
    %1140 = vmatpush1.bf16.msra.mxu0 0
    %1141 = vmatprep.subr.bf16.mxu0 0
    %1142 = vmatpush1.bf16.msra.mxu0 0
    %1143 = vmatprep.subr.bf16.mxu0 0
    %1144 = vmatpush1.bf16.msra.mxu0 0
    %1145 = vmatprep.subr.bf16.mxu0 0
    %1146 = vmatpush1.bf16.msra.mxu0 0
    %1147 = vmatprep.subr.bf16.mxu0 0
    %1148 = vmatpush1.bf16.msra.mxu0 0
    %1149 = vmatprep.subr.bf16.mxu0 0
    %1150 = vmatpush1.bf16.msra.mxu0 0
    %1151 = vmatprep.subr.bf16.mxu0 0
    %1152 = vmatpush1.bf16.msra.mxu0 0
    %1153 = vmatprep.subr.bf16.mxu0 0
    %1154 = vmatpush1.bf16.msra.mxu0 0
    %1155 = vmatprep.subr.bf16.mxu0 0
    %1156 = vmatpush1.bf16.msra.mxu0 0
    %1157 = vmatprep.subr.bf16.mxu0 0
    %1158 = vmatpush1.bf16.msra.mxu0 0
    %1159 = vmatprep.mubr.bf16.mxu0 0
    %1160 = vmatmul.mubr.bf16.gmra.mrb[0].mxu0 %v981
    %v1161 = vpop.f32.mrb[0].mxu0
    %v1162 = vadd.f32 %v846, %v1161
    %v1163 = vpop.f32.mrb[0].mxu0
    %v1164 = vpop.f32.mrb[0].mxu0
    %v1165 = vpop.f32.mrb[0].mxu0
    %1166 = vdwg.mxu0
    %1167 = vst [vmem:[#allocation2] sm:$0xff] %v1039
    %1168 = vst [vmem:[#allocation2 + $0x8] sm:$0xff] %v1041
    %1169 = vst [vmem:[#allocation2 + $0x10] sm:$0xff] %v1080
    %1170 = vst [vmem:[#allocation2 + $0x18] sm:$0xff] %v1082
    %1171 = vst [vmem:[#allocation2 + $0x20] sm:$0xff] %v1121
    %1172 = vst [vmem:[#allocation2 + $0x28] sm:$0xff] %v1123
    %1173 = vst.msk [vmem:[#allocation2 + $0x30] sm:$0xff] %vm467, %v1162
    // Predicated region
    $region42: #{tpu_custom_call.1} parent=1 // pred_check
      _
    $region43: #{tpu_custom_call.1} parent=1 // pred_check_branch
      %1175 = sbr.rel (0) target = $region45
    $region44: #{tpu_custom_call.1} parent=1 // pred_region
      %s1177 = ssub.s32 896, 896
      %1178 = vsyncadd [#allocation3], %s1177
      %s1180 = sshll.u32 [#allocation2], 4
      %s1181 = int_to_ptr.vmem [resolvable:$true] %s1180
      %1183 = dma.vmem_to_hbm [thread:$0]  %s1181, 896, %s10, [#allocation3]
    $region45: #{tpu_custom_call.1} parent=1 // pred_fallthru
      _
    // Predicated region
    $region46: #{tpu_custom_call.1} parent=1 // pred_check
      _
    $region47: #{tpu_custom_call.1} parent=1 // pred_check_branch
      %1185 = sbr.rel (0) target = $region49
    $region48: #{tpu_custom_call.1} parent=1 // pred_region
      %s1187 = ssub.s32 128, 128
      %1188 = vsyncadd [#allocation5], %s1187
      %s1190 = sshll.u32 [#allocation4], 4
      %s1191 = int_to_ptr.vmem [resolvable:$true] %s1190
      %1193 = dma.vmem_to_hbm [thread:$0]  %s1191, 128, %s11, [#allocation5]
    $region49: #{tpu_custom_call.1} parent=1 // pred_fallthru
      _
    // Predicated region
    $region50: #{tpu_custom_call.1} parent=1 // pred_check
      _
    $region51: #{tpu_custom_call.1} parent=1 // pred_check_branch
      %1195 = sbr.rel (0) target = $region53
    $region52: #{tpu_custom_call.1} parent=1 // pred_region
      %1196 = dma.done [#allocation3], 896
    $region53: #{tpu_custom_call.1} parent=1 // pred_fallthru
      _
    // Predicated region
    $region54: #{tpu_custom_call.1} parent=1 // pred_check
      _
    $region55: #{tpu_custom_call.1} parent=1 // pred_check_branch
      %1198 = sbr.rel (0) target = $region57
    $region56: #{tpu_custom_call.1} parent=1 // pred_region
      %1199 = dma.done [#allocation5], 128
    $region57: #{tpu_custom_call.1} parent=1 // pred_fallthru
      _
    %1200 = vsyncpa [#allocation3], 1
    %1201 = vsyncpa [#allocation5], 1

</llo_original>
